<compile_context>
chip_gen: v7x
topology: tpu7x:2x2x1
jax: 0.10.0
libtpu: 0.0.40
codegen_flags: <defaults>
</compile_context>

<pallas_src>
import jax
import jax.numpy as jnp
from jax.experimental import pallas as pl
from jax.experimental.pallas import tpu as pltpu


def _rope_kernel(pos_ref, inv_freq_ref, cos_ref, sin_ref):
    # pos_ref:       (tile_rows, 1)  int32 positions (flattened B*S rows)
    # inv_freq_ref:  (1, dim)        float32, halves pre-duplicated, resident
    # cos_ref/sin_ref: (tile_rows, dim) in the output dtype
    pos = pos_ref[...].astype(jnp.float32)          # VPU cast, hidden by stores
    freqs = pos * inv_freq_ref[...]                 # (tile_rows, dim) broadcast mul
    cos_ref[...] = jnp.cos(freqs).astype(cos_ref.dtype)   # single unmasked store
    sin_ref[...] = jnp.sin(freqs).astype(sin_ref.dtype)   # single unmasked store


def _round_up_8(n):
    return -(-n // 8) * 8


def phi3_rotary_embedding(x, position_ids, dim, base=10000.0, tile_rows=2048):
    """Pallas equivalent of Phi3RotaryEmbedding.forward.

    x:            array whose dtype determines the output dtype (any shape).
    position_ids: (B, S) integer positions.
    Returns (cos, sin), each (B, S, dim) in x.dtype.
    """
    half = dim // 2
    # inv_freq = 1 / base ** (arange(0, dim, 2) / dim), duplicated to full width
    # so emb = cat((freqs, freqs), -1) falls out of a single broadcast multiply.
    inv_freq = 1.0 / (base ** (jnp.arange(0, dim, 2, dtype=jnp.float32) / dim))
    inv_freq_full = jnp.concatenate([inv_freq, inv_freq]).reshape(1, 2 * half)

    B, S = position_ids.shape
    R = B * S
    out_dtype = x.dtype
    out_bytes = jnp.dtype(out_dtype).itemsize

    # tile_rows: multiple of 8, no larger than (rounded-up) R.
    tile_rows = max(8, min(_round_up_8(tile_rows), _round_up_8(R)))
    # v7x: ensure >=2 grid steps so the "parallel" axis spans both TensorCores.
    if R > 8 and pl.cdiv(R, tile_rows) == 1:
        tile_rows = _round_up_8(-(-R // 2))
    num_tiles = pl.cdiv(R, tile_rows)   # ragged last block handled by Pallas

    # Metadata-only reshape; int32 cast is a no-op for typical int32 inputs.
    pos = position_ids.reshape(R, 1).astype(jnp.int32)

    cost = pl.CostEstimate(
        flops=R * dim,                                   # the broadcast multiply
        transcendentals=2 * R * dim,                     # cos + sin
        bytes_accessed=2 * R * dim * out_bytes + R * 4 + dim * 4,
    )

    grid_spec = pltpu.PrefetchScalarGridSpec(
        num_scalar_prefetch=0,
        grid=(num_tiles,),
        in_specs=[
            pl.BlockSpec((tile_rows, 1), lambda i: (i, 0)),      # positions
            pl.BlockSpec((1, dim), lambda i: (0, 0)),            # inv_freq (resident)
        ],
        out_specs=[
            pl.BlockSpec((tile_rows, dim), lambda i: (i, 0)),    # cos
            pl.BlockSpec((tile_rows, dim), lambda i: (i, 0)),    # sin
        ],
    )

    cos, sin = pl.pallas_call(
        _rope_kernel,
        out_shape=(
            jax.ShapeDtypeStruct((R, dim), out_dtype),
            jax.ShapeDtypeStruct((R, dim), out_dtype),
        ),
        grid_spec=grid_spec,
        compiler_params=pltpu.CompilerParams(
            dimension_semantics=("parallel",),
        ),
        cost_estimate=cost,
    )(pos, inv_freq_full)

    # TODO(synk): HF's LongRoPE/su/yarn-scaled Phi-3 variants (different
    # short/long inv_freq tables + attention_scaling) are not implemented;
    # this matches the base Phi3RotaryEmbedding only, as in the spec.
    return cos.reshape(B, S, dim), sin.reshape(B, S, dim)


def _reference(x, position_ids, dim, base=10000.0):
    inv_freq = 1.0 / (base ** (jnp.arange(0, dim, 2, dtype=jnp.float32) / dim))
    freqs = position_ids.astype(jnp.float32)[:, :, None] * inv_freq[None, None, :]
    emb = jnp.concatenate([freqs, freqs], axis=-1)
    return jnp.cos(emb).astype(x.dtype), jnp.sin(emb).astype(x.dtype)


if __name__ == "__main__":
    key = jax.random.PRNGKey(0)
    B, S, H, dim = 2, 8, 4, 32   # batch, seq, heads, rotary dim

    # x only contributes its dtype (as in the PyTorch module).
    x = jax.random.normal(key, (B, H, S, dim), dtype=jnp.float32)
    position_ids = jnp.broadcast_to(jnp.arange(S, dtype=jnp.int32)[None, :], (B, S))

    cos, sin = phi3_rotary_embedding(x, position_ids, dim)
    jax.block_until_ready((cos, sin))

    cos_ref, sin_ref = _reference(x, position_ids, dim)
    assert cos.shape == (B, S, dim) and sin.shape == (B, S, dim)
    assert cos.dtype == x.dtype and sin.dtype == x.dtype
    assert jnp.allclose(cos, cos_ref, atol=1e-5, rtol=1e-5)
    assert jnp.allclose(sin, sin_ref, atol=1e-5, rtol=1e-5)

    # Exercise the ragged-last-block + multi-tile path as well.
    B2, S2 = 3, 7   # R = 21, not a multiple of 8 and forces 2 grid steps
    pos2 = jnp.broadcast_to(jnp.arange(S2, dtype=jnp.int32)[None, :], (B2, S2))
    x2 = jnp.zeros((B2, H, S2, dim), dtype=jnp.bfloat16)
    cos2, sin2 = phi3_rotary_embedding(x2, pos2, dim)
    jax.block_until_ready((cos2, sin2))
    cos2_ref, sin2_ref = _reference(x2, pos2, dim)
    assert cos2.dtype == jnp.bfloat16 and cos2.shape == (B2, S2, dim)
    assert jnp.allclose(cos2.astype(jnp.float32), cos2_ref.astype(jnp.float32),
                        atol=1e-2, rtol=1e-2)
    assert jnp.allclose(sin2.astype(jnp.float32), sin2_ref.astype(jnp.float32),
                        atol=1e-2, rtol=1e-2)

    print("KERNEL_OK")
</pallas_src>

<mosaic_0001>
module attributes {stable_mosaic.version = 11 : i64} {
  func.func @_rope_kernel(%arg0: i32, %arg1: memref<8x1xi32, #tpu.memory_space<vmem>>, %arg2: memref<1x32xf32, #tpu.memory_space<vmem>>, %arg3: memref<8x32xf32, #tpu.memory_space<vmem>>, %arg4: memref<8x32xf32, #tpu.memory_space<vmem>>) attributes {dimension_semantics = [#tpu.dimension_semantics<parallel>], iteration_bounds = array<i64: 2>, scalar_prefetch = 0 : i64, scratch_operands = 0 : i64, tpu.core_type = #tpu.core_type<tc>, window_params = [{transform_indices = @transform_0, window_bounds = array<i64: 8, 1>}, {pipeline_mode = #tpu.pipeline_mode<synchronous>, transform_indices = @transform_1, window_bounds = array<i64: 1, 32>}, {transform_indices = @transform_2, window_bounds = array<i64: 8, 32>}, {transform_indices = @transform_3, window_bounds = array<i64: 8, 32>}]} {
    %c0 = arith.constant 0 : index
    %c0_0 = arith.constant 0 : index
    %0 = vector.load %arg1[%c0, %c0_0] : memref<8x1xi32, #tpu.memory_space<vmem>>, vector<8x1xi32>
    %1 = arith.sitofp %0 : vector<8x1xi32> to vector<8x1xf32>
    %c0_1 = arith.constant 0 : index
    %c0_2 = arith.constant 0 : index
    %2 = vector.load %arg2[%c0_1, %c0_2] : memref<1x32xf32, #tpu.memory_space<vmem>>, vector<1x32xf32>
    %3 = vector.broadcast %1 : vector<8x1xf32> to vector<8x32xf32>
    %4 = vector.broadcast %2 : vector<1x32xf32> to vector<8x32xf32>
    %5 = arith.mulf %3, %4 : vector<8x32xf32>
    %6 = math.cos %5 : vector<8x32xf32>
    %c0_3 = arith.constant 0 : index
    %c0_4 = arith.constant 0 : index
    %7 = vector.load %arg3[%c0_3, %c0_4] : memref<8x32xf32, #tpu.memory_space<vmem>>, vector<8x32xf32>
    tpu.vector_store %arg3[%c0_3, %c0_4], %6 {strides = array<i32>} : memref<8x32xf32, #tpu.memory_space<vmem>>, vector<8x32xf32>,
    %8 = math.sin %5 : vector<8x32xf32>
    %c0_5 = arith.constant 0 : index
    %c0_6 = arith.constant 0 : index
    %9 = vector.load %arg4[%c0_5, %c0_6] : memref<8x32xf32, #tpu.memory_space<vmem>>, vector<8x32xf32>
    tpu.vector_store %arg4[%c0_5, %c0_6], %8 {strides = array<i32>} : memref<8x32xf32, #tpu.memory_space<vmem>>, vector<8x32xf32>,
    return
  }
  func.func @transform_0(%arg0: i32) -> (i32, i32) {
    %c0_i32 = arith.constant 0 : i32
    %c0_i32_0 = arith.constant 0 : i32
    return %arg0, %c0_i32 : i32, i32
  }
  func.func @transform_1(%arg0: i32) -> (i32, i32) {
    %c0_i32 = arith.constant 0 : i32
    %c0_i32_0 = arith.constant 0 : i32
    %c0_i32_1 = arith.constant 0 : i32
    return %c0_i32, %c0_i32_0 : i32, i32
  }
  func.func @transform_2(%arg0: i32) -> (i32, i32) {
    %c0_i32 = arith.constant 0 : i32
    %c0_i32_0 = arith.constant 0 : i32
    return %arg0, %c0_i32 : i32, i32
  }
  func.func @transform_3(%arg0: i32) -> (i32, i32) {
    %c0_i32 = arith.constant 0 : i32
    %c0_i32_0 = arith.constant 0 : i32
    return %arg0, %c0_i32 : i32, i32
  }
}

</mosaic_0001>

<llo_original>
// kernel: tpu_custom_call.1
$region0: #{tpu_custom_call.1}
  #allocation0 [shape = 'u32[]', space=smem, size = 0x4, offset = 0x4, fixed_abs, tag = 'smem constant byte address 0x4 - core index']
  #allocation1 [shape = 'u32[144,128]{1,0:T(1,128)}', space=vmem, size = 0x12000, scoped, tag = 'internal scratch']
  %s0 = inlined_call_operand.vmem [shape: s32[16,1], index: 0, kind: input, shape index: {}]
  %s1 = inlined_call_operand.vmem [shape: f32[1,32], index: 1, kind: input, shape index: {}]
  %s2 = inlined_call_operand.hbm [shape: f32[16,32], index: 2, kind: output, shape index: {0}]
  %s3 = inlined_call_operand.hbm [shape: f32[16,32], index: 3, kind: output, shape index: {1}]
  %4 = xla_tuple %s2, %s3
  %s5 = sld [smem:[#allocation0]]
  $region49: #{tpu_custom_call.1} parent=0
    _
  %s7 = ssub.s32 1, %s5
  %s8 = scalar_select 0, %s7, %s5
  $region1: #{tpu_custom_call.1} parent=0
    #allocation2 [shape = 'u8[8192]{0}', space=vmem, size = 0x2000, scoped, tag = 'output window, operand 0']
    #allocation3 [shape = 's32[2]{0}', space=sflag, size = 0x8, scoped, tag = 'scoped memory for tpu_custom_call.1']
    #allocation4 [shape = 'u8[8192]{0}', space=vmem, size = 0x2000, scoped, tag = 'output window, operand 1']
    #allocation5 [shape = 's32[2]{0}', space=sflag, size = 0x8, scoped, tag = 'scoped memory for tpu_custom_call.1']
    %9 = vsyncpa [#allocation3], 0
    %s10 = scalar_lea.sflag [#allocation3], 1
    %11 = vsyncpa %s10, 0
    %12 = vsyncpa [#allocation5], 0
    %s13 = scalar_lea.sflag [#allocation5], 1
    %14 = vsyncpa %s13, 0
    loop: start=0, step=1, limit=4
    $region2: #{tpu_custom_call.1} parent=1 // loop_pre_header
      _
    $region3: #{tpu_custom_call.1} parent=1 // loop_header
      %s16 = sphi 0, %s20
      %p17 = scmp.ge.s32.totalorder %s16, 4
      %s26 = sphi 0, %s28
      %s29 = sphi 0, %s26
      %s30 = sphi 0, %s29
      %s46 = sphi 0, %s30
      %s50 = sphi 0, %s50
      %s52 = sphi 0, %s50
      %s53 = sphi 0, %s52
      %s67 = sphi 0, %s53
      %s73 = sphi 0, %s75
      %s76 = sphi 0, %s73
      %s77 = sphi 0, %s76
      %s93 = sphi 0, %s77
      %s99 = sphi 0, %s101
      %s102 = sphi 0, %s99
      %s103 = sphi 0, %s102
      %s119 = sphi 0, %s103
    $region4: #{tpu_custom_call.1} parent=1 // loop_header_branch
      %19 = sbr.rel (%p17) target = $region8
    $region5: #{tpu_custom_call.1} parent=1 // loop_body
      %s21 = ssub.s32 %s16, 1
      %s22 = ssub.s32 %s16, 2
      %s23 = sadd.s32 %s16, 1
      %s24 = ssub.s32 %s16, %s23
      %p25 = scmp.eq.s32.totalorder %s24, 0
      %s27 = sadd.s32 %s26, 1
      %s28 = scalar_select %p25, %s26, %s27
      %p31 = pneg %p25
      %p32 = scmp.eq.s32.totalorder %s16, 1
      %p33 = por %p31, %p32
      %p34 = scmp.ne.s32.totalorder %s26, %s29
      %p35 = scmp.eq.s32.totalorder %s16, 0
      %p36 = por %p34, %p35
      %p37 = scmp.ne.s32.totalorder %s26, %s29
      %p38 = scmp.eq.s32.totalorder %s21, 1
      %p39 = por %p37, %p38
      %p40 = scmp.ne.s32.totalorder %s29, %s30
      %p41 = scmp.eq.s32.totalorder %s21, 0
      %p42 = por %p40, %p41
      %p43 = scmp.ne.s32.totalorder %s29, %s30
      %p44 = scmp.eq.s32.totalorder %s22, 1
      %p45 = por %p43, %p44
      %p47 = scmp.ne.s32.totalorder %s30, %s46
      %p48 = scmp.eq.s32.totalorder %s22, 0
      %p49 = por %p47, %p48
      %s51 = sadd.s32 %s50, 1
      %p54 = scmp.eq.s32.totalorder %s16, 1
      %p55 = scmp.ne.s32.totalorder %s50, %s52
      %p56 = scmp.eq.s32.totalorder %s16, 0
      %p57 = por %p55, %p56
      %p58 = scmp.ne.s32.totalorder %s50, %s52
      %p59 = scmp.eq.s32.totalorder %s21, 1
      %p60 = por %p58, %p59
      %p61 = scmp.ne.s32.totalorder %s52, %s53
      %p62 = scmp.eq.s32.totalorder %s21, 0
      %p63 = por %p61, %p62
      %p64 = scmp.ne.s32.totalorder %s52, %s53
      %p65 = scmp.eq.s32.totalorder %s22, 1
      %p66 = por %p64, %p65
      %p68 = scmp.ne.s32.totalorder %s53, %s67
      %p69 = scmp.eq.s32.totalorder %s22, 0
      %p70 = por %p68, %p69
      %s71 = ssub.s32 %s16, %s23
      %p72 = scmp.eq.s32.totalorder %s71, 0
      %s74 = sadd.s32 %s73, 1
      %s75 = scalar_select %p72, %s73, %s74
      %p78 = pneg %p72
      %p79 = scmp.eq.s32.totalorder %s16, 1
      %p80 = por %p78, %p79
      %p81 = scmp.ne.s32.totalorder %s73, %s76
      %p82 = scmp.eq.s32.totalorder %s16, 0
      %p83 = por %p81, %p82
      %p84 = scmp.ne.s32.totalorder %s73, %s76
      %p85 = scmp.eq.s32.totalorder %s21, 1
      %p86 = por %p84, %p85
      %p87 = scmp.ne.s32.totalorder %s76, %s77
      %p88 = scmp.eq.s32.totalorder %s21, 0
      %p89 = por %p87, %p88
      %p90 = scmp.ne.s32.totalorder %s76, %s77
      %p91 = scmp.eq.s32.totalorder %s22, 1
      %p92 = por %p90, %p91
      %p94 = scmp.ne.s32.totalorder %s77, %s93
      %p95 = scmp.eq.s32.totalorder %s22, 0
      %p96 = por %p94, %p95
      %s97 = ssub.s32 %s16, %s23
      %p98 = scmp.eq.s32.totalorder %s97, 0
      %s100 = sadd.s32 %s99, 1
      %s101 = scalar_select %p98, %s99, %s100
      %p104 = pneg %p98
      %p105 = scmp.eq.s32.totalorder %s16, 1
      %p106 = por %p104, %p105
      %p107 = scmp.ne.s32.totalorder %s99, %s102
      %p108 = scmp.eq.s32.totalorder %s16, 0
      %p109 = por %p107, %p108
      %p110 = scmp.ne.s32.totalorder %s99, %s102
      %p111 = scmp.eq.s32.totalorder %s21, 1
      %p112 = por %p110, %p111
      %p113 = scmp.ne.s32.totalorder %s102, %s103
      %p114 = scmp.eq.s32.totalorder %s21, 0
      %p115 = por %p113, %p114
      %p116 = scmp.ne.s32.totalorder %s102, %s103
      %p117 = scmp.eq.s32.totalorder %s22, 1
      %p118 = por %p116, %p117
      %p120 = scmp.ne.s32.totalorder %s103, %s119
      %p121 = scmp.eq.s32.totalorder %s22, 0
      %p122 = por %p120, %p121
      %p123 = scmp.le.s32.totalorder 1, %s16
      %p124 = scmp.lt.s32.totalorder %s16, 3
      %p125 = pnand %p123, %p124
      %p126 = pneg %p125
      // Predicated region
      $region9: #{tpu_custom_call.1} parent=5 // pred_check
        _
      $region10: #{tpu_custom_call.1} parent=5 // pred_check_branch
        %128 = sbr.rel (%p125) target = $region12
      $region11: #{tpu_custom_call.1} parent=5 // pred_region
        %s129 = ssub.s32 %s16, 1
        // Predicated region
        $region13: #{tpu_custom_call.1} parent=11 // pred_check
          %p130 = pneg %p63
        $region14: #{tpu_custom_call.1} parent=11 // pred_check_branch
          %132 = sbr.rel (%p130) target = $region16
        $region15: #{tpu_custom_call.1} parent=11 // pred_region
          _
        $region16: #{tpu_custom_call.1} parent=11 // pred_fallthru
          _
      $region12: #{tpu_custom_call.1} parent=5 // pred_fallthru
        _
      %p133 = scmp.lt.s32.totalorder %s16, 2
      // Predicated region
      $region17: #{tpu_custom_call.1} parent=5 // pred_check
        %p134 = pneg %p133
      $region18: #{tpu_custom_call.1} parent=5 // pred_check_branch
        %136 = sbr.rel (%p134) target = $region20
      $region19: #{tpu_custom_call.1} parent=5 // pred_region
        // Predicated region
        $region21: #{tpu_custom_call.1} parent=19 // pred_check
          %p137 = pneg %p36
        $region22: #{tpu_custom_call.1} parent=19 // pred_check_branch
          %139 = sbr.rel (%p137) target = $region24
        $region23: #{tpu_custom_call.1} parent=19 // pred_region
          %p140 = scmp.lt.s32.totalorder %s16, 1
          %s141 = scalar_select %p140, %s16, 1
          %s142 = smul.addr %s141, 8
          %s143 = scalar_lea.vmem %s0, %s142
        $region24: #{tpu_custom_call.1} parent=19 // pred_fallthru
          _
      $region20: #{tpu_custom_call.1} parent=5 // pred_fallthru
        _
      %p144 = scmp.le.s32.totalorder 1, %s16
      %p145 = scmp.lt.s32.totalorder %s16, 3
      %p146 = pnand %p144, %p145
      %p147 = pneg %p146
      // Predicated region
      $region25: #{tpu_custom_call.1} parent=5 // pred_check
        _
      $region26: #{tpu_custom_call.1} parent=5 // pred_check_branch
        %149 = sbr.rel (%p146) target = $region28
      $region27: #{tpu_custom_call.1} parent=5 // pred_region
        %s150 = ssub.s32 %s16, 1
        %p151 = scmp.lt.s32.totalorder %s21, 1
        %s152 = scalar_select %p151, %s21, 1
        %s153 = smul.addr %s152, 8
        %s154 = scalar_lea.vmem %s0, %s153
        %p155 = pneg %p42
        %p156 = pneg %p39
        %p157 = pneg %p63
        %p158 = pneg %p60
        %p159 = pneg %p89
        %p160 = pneg %p86
        %s161 = sand.u32 %s76, 1
        %s162 = scalar_lea.sflag [#allocation3], %s161
        %s163 = sand.u32 %s76, 1
        %s164 = smul.addr %s163, 8
        %s165 = scalar_lea.vmem [#allocation2], %s164
        %p166 = pneg %p115
        %p167 = pneg %p112
        %s168 = sand.u32 %s102, 1
        %s169 = scalar_lea.sflag [#allocation5], %s168
        %s170 = sand.u32 %s102, 1
        %s171 = smul.addr %s170, 8
        %s172 = scalar_lea.vmem [#allocation4], %s171
        %p173 = scmp.lt.s32.totalorder %s21, 1
        %s174 = scalar_select %p173, %s21, 1
        %s175 = smul.addr %s174, 8
        %s176 = scalar_lea.vmem %s0, %s175
        %v177 = vld [vmem:[%s176] sm:$0xff]
        %v178 = vcvt.s32.f32 %v177
        %v179 = vld [vmem:[%s1] sm:$0x1]
        %181 = vset.pattern.permute.xlu0 0
        %182 = vperm.xlu0 %181, %v178
        %v183 = vpop.permute.xlu0 %182
        %v186 = vlaneseq
        %v187 = vshrl.u32 %v186, 7
        %v188 = vsub.s32 0, %v187
        %v189 = vrot.slane %v179, %v188
        %v191 = vmul.f32 %v183, %v189
        %v192 = vand.u32 2147483647, %v191
        %vm193 = vcmp.le.f32.partialorder %v192, 0.7853982
        %vm194 = vcmp.lt.s32.totalorder %v191, 0
        %v195 = vand.u32 %v191, 2139095040
        %v196 = vshrl.u32 %v195, 23
        %v197 = vsub.s32 %v196, 127
        %v198 = vand.u32 2147483647, %v191
        %v199 = vand.u32 %v198, 8388607
        %v200 = vor.u32 %v199, 8388608
        %v201 = vsub.s32 0, %v200
        %v202 = vadd.s32 %v197, 1
        %vm203 = vcmp.gt.s32.totalorder %v202, 0
        %v204 = vsel %vm203, %v202, 0
        %v205 = vshrl.u32 %v204, 5
        %v206 = vand.u32 %v204, 31
        %v207 = vsub.s32 32, %v206
        %v208 = vshrl.u32 683565275, %v207
        %v209 = vshll.u32 683565275, %v206
        %v210 = vshrl.u32 2475754826, %v207
        %v211 = vor.u32 %v209, %v210
        %v212 = vshll.u32 2475754826, %v206
        %v213 = vshrl.u32 2131351028, %v207
        %v214 = vor.u32 %v212, %v213
        %v215 = vshll.u32 2131351028, %v206
        %v216 = vshrl.u32 2102212464, %v207
        %v217 = vor.u32 %v215, %v216
        %v218 = vshll.u32 2102212464, %v206
        %v219 = vshrl.u32 920167782, %v207
        %v220 = vor.u32 %v218, %v219
        %v221 = vshll.u32 920167782, %v206
        %v222 = vshrl.u32 1326507024, %v207
        %v223 = vor.u32 %v221, %v222
        %vm224 = vcmp.lt.s32.totalorder %v205, 1
        %vm225 = vcmp.lt.s32.totalorder %v205, 2
        %vm226 = vcmp.lt.s32.totalorder %v205, 3
        %vm227 = vcmp.lt.s32.totalorder %v205, 4
        %v228 = vsel %vm224, %v208, %v211
        %v229 = vsel %vm227, %v217, 2102212464
        %v230 = vsel %vm226, %v214, %v229
        %v231 = vsel %vm225, %v228, %v230
        %v232 = vsel %vm224, %v211, %v214
        %v233 = vsel %vm227, %v220, 920167782
        %v234 = vsel %vm226, %v217, %v233
        %v235 = vsel %vm225, %v232, %v234
        %v236 = vsel %vm224, %v214, %v217
        %v237 = vsel %vm227, %v223, 1326507024
        %v238 = vsel %vm226, %v220, %v237
        %v239 = vsel %vm225, %v236, %v238
        %v240 = vshll.u32 %v200, 8
        %v241 = vmul.u32.u64.compose %v240, %v239
        %v242 = vextract.low.u32 %v241
        %v243 = vextract.high.u32 %v241
        %v244 = vmul.u32.u64.compose %v240, %v235
        %v245 = vextract.low.u32 %v244
        %v246 = vextract.high.u32 %v244
        %v247 = vmul.u32 %v240, %v231
        %v248 = vadd.s32 %v243, %v245
        %vm249 = vc.u32 %v243, %v245
        %v250 = vadd.s32 %v246, 1
        %v251 = vsel %vm249, %v250, %v246
        %v252 = vadd.s32 %v247, %v251
        %v253 = vadd.s32 %v252, 536870912
        %v254 = vshrl.u32 %v253, 30
        %v255 = vshll.u32 %v254, 30
        %v256 = vsub.s32 %v252, %v255
        %vm257 = vcmp.lt.s32.totalorder %v256, 0
        %v258 = vsub.s32 0, %v256
        %v259 = vsel %vm257, %v258, %v256
        %v260 = vclz %v259
        %v261 = vsub.s32 %v260, 2
        %vm262 = vcmp.gt.s32.totalorder 0, %v261
        %v263 = vsel %vm262, 0, %v261
        %v264 = vsub.s32 32, %v263
        %v265 = vshll.u32 %v256, %v263
        %v266 = vshrl.u32 %v248, %v264
        %v267 = vor.u32 %v265, %v266
        %v268 = vsub.s32 4294967266, %v263
        %v269 = vadd.s32 %v268, 127
        %v270 = vshll.u32 %v269, 23
        %v271 = vor.u32 4788187, %v270
        %v272 = vand.u32 2147483647, %v271
        %v274 = vcvt.s32.f32 %v267
        %v275 = vmul.f32 %v274, %v272
        %v276 = vxor.u32 %v275, 2147483648
        %v277 = vsel %vm194, %v276, %v275
        %v278 = vsub.s32 4, %v254
        %v279 = vsel %vm194, %v278, %v254
        %v280 = vsel %vm193, %v191, %v277
        %v281 = vsel %vm193, 0, %v279
        %v282 = vcosq.f32.pop %v280
        %v283 = vsinq.f32.pop %v280
        %vm284 = vweird.f32 %v191
        %v285 = vand.u32 %v281, 3
        %vm286 = vcmp.lt.s32.totalorder %v285, 2
        %vm287 = vcmp.eq.s32.totalorder %v285, 0
        %v288 = vxor.u32 %v283, 2147483648
        %v289 = vsel %vm287, %v282, %v288
        %vm290 = vcmp.eq.s32.totalorder %v285, 2
        %v291 = vxor.u32 %v282, 2147483648
        %v292 = vsel %vm290, %v291, %v283
        %v293 = vsel %vm286, %v289, %v292
        %v294 = vsel %vm284, nan, %v293
        %vm295 = vcmask 261120
        %296 = vst.msk [vmem:[%s165] sm:$0xff] %vm295, %v294
        %v297 = vand.u32 2147483647, %v191
        %vm298 = vcmp.le.f32.partialorder %v297, 0.7853982
        %vm299 = vcmp.lt.s32.totalorder %v191, 0
        %v300 = vand.u32 %v191, 2139095040
        %v301 = vshrl.u32 %v300, 23
        %v302 = vsub.s32 %v301, 127
        %v303 = vand.u32 2147483647, %v191
        %v304 = vand.u32 %v303, 8388607
        %v305 = vor.u32 %v304, 8388608
        %v306 = vsub.s32 0, %v305
        %v307 = vadd.s32 %v302, 1
        %vm308 = vcmp.gt.s32.totalorder %v307, 0
        %v309 = vsel %vm308, %v307, 0
        %v310 = vshrl.u32 %v309, 5
        %v311 = vand.u32 %v309, 31
        %v312 = vsub.s32 32, %v311
        %v313 = vshrl.u32 683565275, %v312
        %v314 = vshll.u32 683565275, %v311
        %v315 = vshrl.u32 2475754826, %v312
        %v316 = vor.u32 %v314, %v315
        %v317 = vshll.u32 2475754826, %v311
        %v318 = vshrl.u32 2131351028, %v312
        %v319 = vor.u32 %v317, %v318
        %v320 = vshll.u32 2131351028, %v311
        %v321 = vshrl.u32 2102212464, %v312
        %v322 = vor.u32 %v320, %v321
        %v323 = vshll.u32 2102212464, %v311
        %v324 = vshrl.u32 920167782, %v312
        %v325 = vor.u32 %v323, %v324
        %v326 = vshll.u32 920167782, %v311
        %v327 = vshrl.u32 1326507024, %v312
        %v328 = vor.u32 %v326, %v327
        %vm329 = vcmp.lt.s32.totalorder %v310, 1
        %vm330 = vcmp.lt.s32.totalorder %v310, 2
        %vm331 = vcmp.lt.s32.totalorder %v310, 3
        %vm332 = vcmp.lt.s32.totalorder %v310, 4
        %v333 = vsel %vm329, %v313, %v316
        %v334 = vsel %vm332, %v322, 2102212464
        %v335 = vsel %vm331, %v319, %v334
        %v336 = vsel %vm330, %v333, %v335
        %v337 = vsel %vm329, %v316, %v319
        %v338 = vsel %vm332, %v325, 920167782
        %v339 = vsel %vm331, %v322, %v338
        %v340 = vsel %vm330, %v337, %v339
        %v341 = vsel %vm329, %v319, %v322
        %v342 = vsel %vm332, %v328, 1326507024
        %v343 = vsel %vm331, %v325, %v342
        %v344 = vsel %vm330, %v341, %v343
        %v345 = vshll.u32 %v305, 8
        %v346 = vmul.u32.u64.compose %v345, %v344
        %v347 = vextract.low.u32 %v346
        %v348 = vextract.high.u32 %v346
        %v349 = vmul.u32.u64.compose %v345, %v340
        %v350 = vextract.low.u32 %v349
        %v351 = vextract.high.u32 %v349
        %v352 = vmul.u32 %v345, %v336
        %v353 = vadd.s32 %v348, %v350
        %vm354 = vc.u32 %v348, %v350
        %v355 = vadd.s32 %v351, 1
        %v356 = vsel %vm354, %v355, %v351
        %v357 = vadd.s32 %v352, %v356
        %v358 = vadd.s32 %v357, 536870912
        %v359 = vshrl.u32 %v358, 30
        %v360 = vshll.u32 %v359, 30
        %v361 = vsub.s32 %v357, %v360
        %vm362 = vcmp.lt.s32.totalorder %v361, 0
        %v363 = vsub.s32 0, %v361
        %v364 = vsel %vm362, %v363, %v361
        %v365 = vclz %v364
        %v366 = vsub.s32 %v365, 2
        %vm367 = vcmp.gt.s32.totalorder 0, %v366
        %v368 = vsel %vm367, 0, %v366
        %v369 = vsub.s32 32, %v368
        %v370 = vshll.u32 %v361, %v368
        %v371 = vshrl.u32 %v353, %v369
        %v372 = vor.u32 %v370, %v371
        %v373 = vsub.s32 4294967266, %v368
        %v374 = vadd.s32 %v373, 127
        %v375 = vshll.u32 %v374, 23
        %v376 = vor.u32 4788187, %v375
        %v377 = vand.u32 2147483647, %v376
        %v379 = vcvt.s32.f32 %v372
        %v380 = vmul.f32 %v379, %v377
        %v381 = vxor.u32 %v380, 2147483648
        %v382 = vsel %vm299, %v381, %v380
        %v383 = vsub.s32 4, %v359
        %v384 = vsel %vm299, %v383, %v359
        %v385 = vsel %vm298, %v191, %v382
        %v386 = vsel %vm298, 0, %v384
        %v387 = vcosq.f32.pop %v385
        %v388 = vsinq.f32.pop %v385
        %vm389 = vweird.f32 %v191
        %v390 = vadd.s32 %v386, 3
        %v391 = vand.u32 %v390, 3
        %vm392 = vcmp.lt.s32.totalorder %v391, 2
        %vm393 = vcmp.eq.s32.totalorder %v391, 0
        %v394 = vxor.u32 %v388, 2147483648
        %v395 = vsel %vm393, %v387, %v394
        %vm396 = vcmp.eq.s32.totalorder %v391, 2
        %v397 = vxor.u32 %v387, 2147483648
        %v398 = vsel %vm396, %v397, %v388
        %v399 = vsel %vm392, %v395, %v398
        %v400 = vsel %vm389, nan, %v399
        %401 = vst.msk [vmem:[%s172] sm:$0xff] %vm295, %v400
        %s402 = sand.u32 %s76, 1
        %s403 = scalar_lea.sflag [#allocation3], %s402
        %s404 = sand.u32 %s76, 1
        %s405 = smul.addr %s404, 8
        %s406 = scalar_lea.vmem [#allocation2], %s405
        %s407 = sand.u32 %s102, 1
        %s408 = scalar_lea.sflag [#allocation5], %s407
        %s409 = sand.u32 %s102, 1
        %s410 = smul.addr %s409, 8
        %s411 = scalar_lea.vmem [#allocation4], %s410
        // Predicated region
        $region29: #{tpu_custom_call.1} parent=27 // pred_check
          %p412 = pneg %p86
        $region30: #{tpu_custom_call.1} parent=27 // pred_check_branch
          %414 = sbr.rel (%p412) target = $region32
        $region31: #{tpu_custom_call.1} parent=27 // pred_region
          %s416 = ssub.s32 128, 128
          %417 = vsyncadd %s403, %s416
          %s418 = smul.addr %s21, 128
          %s419 = scalar_lea.hbm %s2, %s418
          %s421 = sshll.u32 %s406, 4
          %s422 = int_to_ptr.vmem [resolvable:$true] %s421
          %424 = dma.vmem_to_hbm [thread:$0]  %s422, 128, %s419, %s403
        $region32: #{tpu_custom_call.1} parent=27 // pred_fallthru
          _
        // Predicated region
        $region33: #{tpu_custom_call.1} parent=27 // pred_check
          %p425 = pneg %p112
        $region34: #{tpu_custom_call.1} parent=27 // pred_check_branch
          %427 = sbr.rel (%p425) target = $region36
        $region35: #{tpu_custom_call.1} parent=27 // pred_region
          %s429 = ssub.s32 128, 128
          %430 = vsyncadd %s408, %s429
          %s431 = smul.addr %s21, 128
          %s432 = scalar_lea.hbm %s3, %s431
          %s434 = sshll.u32 %s411, 4
          %s435 = int_to_ptr.vmem [resolvable:$true] %s434
          %437 = dma.vmem_to_hbm [thread:$0]  %s435, 128, %s432, %s408
        $region36: #{tpu_custom_call.1} parent=27 // pred_fallthru
          _
      $region28: #{tpu_custom_call.1} parent=5 // pred_fallthru
        _
      %p438 = scmp.le.s32.totalorder 2, %s16
      // Predicated region
      $region37: #{tpu_custom_call.1} parent=5 // pred_check
        %p439 = pneg %p438
      $region38: #{tpu_custom_call.1} parent=5 // pred_check_branch
        %441 = sbr.rel (%p439) target = $region40
      $region39: #{tpu_custom_call.1} parent=5 // pred_region
        %s442 = ssub.s32 %s16, 2
        // Predicated region
        $region41: #{tpu_custom_call.1} parent=39 // pred_check
          %p443 = pneg %p92
        $region42: #{tpu_custom_call.1} parent=39 // pred_check_branch
          %445 = sbr.rel (%p443) target = $region44
        $region43: #{tpu_custom_call.1} parent=39 // pred_region
          %s446 = sand.u32 %s77, 1
          %s447 = scalar_lea.sflag [#allocation3], %s446
          %s448 = sand.u32 %s77, 1
          %s449 = smul.addr %s448, 8
          %s450 = scalar_lea.vmem [#allocation2], %s449
          %451 = dma.done %s447, 128
        $region44: #{tpu_custom_call.1} parent=39 // pred_fallthru
          _
        // Predicated region
        $region45: #{tpu_custom_call.1} parent=39 // pred_check
          %p452 = pneg %p118
        $region46: #{tpu_custom_call.1} parent=39 // pred_check_branch
          %454 = sbr.rel (%p452) target = $region48
        $region47: #{tpu_custom_call.1} parent=39 // pred_region
          %s455 = sand.u32 %s103, 1
          %s456 = scalar_lea.sflag [#allocation5], %s455
          %s457 = sand.u32 %s103, 1
          %s458 = smul.addr %s457, 8
          %s459 = scalar_lea.vmem [#allocation4], %s458
          %460 = dma.done %s456, 128
        $region48: #{tpu_custom_call.1} parent=39 // pred_fallthru
          _
      $region40: #{tpu_custom_call.1} parent=5 // pred_fallthru
        _
    $region6: #{tpu_custom_call.1} parent=1 // loop_footer
      %s20 = sadd.s32 1, %s16
    $region7: #{tpu_custom_call.1} parent=1 // loop_footer_branch
      %15 = sbr.rel target = $region3
    $region8: #{tpu_custom_call.1} parent=1 // loop_exit
      _
    %461 = vsyncpa [#allocation3], 1
    %s462 = scalar_lea.sflag [#allocation3], 1
    %463 = vsyncpa %s462, 1
    %464 = vsyncpa [#allocation5], 1
    %s465 = scalar_lea.sflag [#allocation5], 1
    %466 = vsyncpa %s465, 1

</llo_original>
